<compile_context>
chip_gen: v7x
topology: tpu7x:2x2x1
jax: 0.10.0
libtpu: 0.0.40
codegen_flags: <defaults>
</compile_context>

<pallas_src>
import math
from functools import partial

import jax
import jax.numpy as jnp
from jax.experimental import pallas as pl
from jax.experimental.pallas import tpu as pltpu

A_DIM = 40
X_DIM = 4                       # osu_dreamer hit-signal channel count
VALID_PAD = 1024
UNET_DEPTH = 4                  # len(h_dim_mult)

# ~12 MiB of streamed input per grid step (x + noise + audio = 48 channels).
TARGET_BLOCK_BYTES = 12 << 20


def _round_up(n, m):
    return (n + m - 1) // m * m


# ----------------------------- plain-JAX glue ---------------------------------------

def _cosine_log_snr(t, s=0.008, eps=1e-5):
    # imagen GaussianDiffusionContinuousTimes 'cosine' schedule
    return -jnp.log(jnp.clip(jnp.cos((t + s) / (1 + s) * math.pi * 0.5) ** -2 - 1.0, eps, None))


def _inference_pad(x):
    # F.pad(..., mode='replicate') then right-pad to a multiple of 2**unet_depth
    x = jnp.pad(x, ((0, 0), (0, 0), (VALID_PAD, VALID_PAD)), mode="edge")
    L = x.shape[-1]
    pad = (1 + L // 2 ** UNET_DEPTH) * 2 ** UNET_DEPTH - L
    x = jnp.pad(x, ((0, 0), (0, 0), (0, pad)), mode="edge")
    return x, pad


# ----------------------------- Pallas kernel -----------------------------------------

def _p_losses_kernel(x_ref, n_ref, a_ref, wxa_ref, wxn_ref, wa_ref, tb_ref,
                     loss_ref, acc_ref, *, l_valid, tile_l):
    """One (batch, L-chunk, L-tile) grid step.

    x_ref  : (X_DIM, TL)   x_start columns
    n_ref  : (X_DIM, TL)   valid-window noise columns (q_sample noise AND the MSE target)
    a_ref  : (A_DIM, TL)   audio columns
    wxa_ref: (X_DIM, X_DIM)  per-batch alpha * Wx
    wxn_ref: (X_DIM, X_DIM)  per-batch sigma * Wx
    wa_ref : (X_DIM, A_DIM)  shared Wa
    tb_ref : (X_DIM, 1)      per-batch temb * log_snr
    loss_ref: (1, 128)       per-(batch, chunk) partial mean (written once, at finalize)
    acc_ref : (X_DIM, TL) f32  lane-parallel squared-error accumulator (VMEM scratch)
    """
    c = pl.program_id(1)            # megacore L-chunk
    l = pl.program_id(2)            # L tile inside the chunk
    num_l = pl.num_programs(2)

    x = x_ref[...].astype(jnp.float32)
    nz = n_ref[...].astype(jnp.float32)
    au = a_ref[...].astype(jnp.float32)

    # q_sample + 1x1 channel-mix fused into three tiny MXU dots (free filler under the DMA):
    #   pred = (alpha*Wx) @ x + (sigma*Wx) @ noise + Wa @ a + temb * log_snr
    # TODO(synk): the full Imagen UNet (resnet/attention stack) is not part of the provided
    # source; this deterministic 1x1-conv + noise-level-embedding stand-in is used instead.
    pred = (jnp.dot(wxa_ref[...].astype(jnp.float32), x, preferred_element_type=jnp.float32)
            + jnp.dot(wxn_ref[...].astype(jnp.float32), nz, preferred_element_type=jnp.float32)
            + jnp.dot(wa_ref[...].astype(jnp.float32), au, preferred_element_type=jnp.float32)
            + tb_ref[...])                                            # (X_DIM, TL) f32

    # pred_objective == 'noise'  ->  target = noise (read directly from the noise ref)
    diff = pred - nz

    # Global column index (chunk-major).  jnp.where (not multiply-by-mask) so NaN/Inf in the
    # undefined tail of a partial block / clamped duplicate tile cannot leak into the sum.
    col = jax.lax.broadcasted_iota(jnp.int32, (1, tile_l), 1) + (c * num_l + l) * tile_l
    sq = jnp.where(col < l_valid, diff * diff, 0.0)                   # (X_DIM, TL) f32

    # Lane-parallel accumulation: VPU adds only; the single cross-lane reduce is deferred
    # to the finalize step.
    @pl.when(l == 0)
    def _init():
        acc_ref[...] = sq

    @pl.when(l != 0)
    def _accum():
        acc_ref[...] += sq

    @pl.when(l == num_l - 1)
    def _finalize():
        # per-batch mean ('b ... -> b'): denominator fixed at X_DIM * L_valid.  Each L-chunk
        # writes its own partial mean; the wrapper sums the chunks.
        total = jnp.sum(acc_ref[...]) * (1.0 / (X_DIM * l_valid))
        loss_ref[...] = jnp.broadcast_to(total, loss_ref.shape)


def p_losses(x_start, a, times, noise_valid, wx, wa, temb, *, max_tile_cols=None):
    """noise_valid is the valid-window noise (B, X_DIM, L): only these columns reach the loss
    for the pointwise stand-in network, so the kernel never touches the 2*VALID_PAD(+align)
    replicate-padded columns at all.
    TODO(synk): re-introduce the replicate padding / full-length noise once a real
    (non-pointwise) UNet with a receptive field replaces the 1x1 stand-in."""
    B, _, L = x_start.shape
    assert noise_valid.shape == (B, X_DIM, L)
    assert a.shape == (B, A_DIM, L)

    # --- tiny per-batch parameter prep (O(B*16) elements; negligible HBM traffic) ---
    log_snr = _cosine_log_snr(times).astype(jnp.float32)            # (B,)
    alpha = jnp.sqrt(jax.nn.sigmoid(log_snr))
    sigma = jnp.sqrt(jax.nn.sigmoid(-log_snr))
    wx32 = wx.astype(jnp.float32)
    wxa = alpha[:, None, None] * wx32                                 # (B, X_DIM, X_DIM)
    wxn = sigma[:, None, None] * wx32                                 # (B, X_DIM, X_DIM)
    wa32 = wa.astype(jnp.float32)                                     # (X_DIM, A_DIM)
    tb = temb.astype(jnp.float32)[None] * log_snr[:, None, None]      # (B, X_DIM, 1)

    # --- length tiling: ~12 MiB of streamed input per step, lane-aligned tiles ---
    itemsize = max(x_start.dtype.itemsize, noise_valid.dtype.itemsize, a.dtype.itemsize)
    tile_cap = max(128, (TARGET_BLOCK_BYTES // ((2 * X_DIM + A_DIM) * itemsize)) // 128 * 128)
    if max_tile_cols is not None:
        tile_cap = max(128, min(tile_cap, max_tile_cols // 128 * 128))
    tile_l = L if L < 128 else min(tile_cap, _round_up(L, 128))
    num_l_total = pl.cdiv(L, tile_l)

    # Megacore-friendly split of L into 2 "parallel" chunks so both v7x TensorCores stream
    # HBM even when B == 1 / odd.  Odd tile counts are handled by clamping the duplicate
    # tile's block index (its contribution is masked to zero in-kernel).
    nchunks = 2 if num_l_total >= 2 else 1
    num_l = pl.cdiv(num_l_total, nchunks)

    def data_map(b, c, l):
        return (b, 0, jnp.minimum(c * num_l + l, num_l_total - 1))

    kernel = partial(_p_losses_kernel, l_valid=L, tile_l=tile_l)

    cost = pl.CostEstimate(
        flops=int(2 * B * L * X_DIM * (2 * X_DIM + A_DIM)),
        transcendentals=0,
        bytes_accessed=int(B * (2 * X_DIM + A_DIM) * L * itemsize + B * nchunks * 128 * 4),
    )

    out = pl.pallas_call(
        kernel,
        out_shape=jax.ShapeDtypeStruct((B, nchunks, 1, 128), jnp.float32),
        grid=(B, nchunks, num_l),
        in_specs=[
            pl.BlockSpec((pl.Squeezed(), X_DIM, tile_l), data_map),               # x_start
            pl.BlockSpec((pl.Squeezed(), X_DIM, tile_l), data_map),               # noise (valid)
            pl.BlockSpec((pl.Squeezed(), A_DIM, tile_l), data_map),               # audio
            pl.BlockSpec((pl.Squeezed(), X_DIM, X_DIM), lambda b, c, l: (b, 0, 0)),  # alpha*Wx
            pl.BlockSpec((pl.Squeezed(), X_DIM, X_DIM), lambda b, c, l: (b, 0, 0)),  # sigma*Wx
            pl.BlockSpec((X_DIM, A_DIM), lambda b, c, l: (0, 0)),                    # Wa
            pl.BlockSpec((pl.Squeezed(), X_DIM, 1), lambda b, c, l: (b, 0, 0)),      # temb*log_snr
        ],
        out_specs=pl.BlockSpec((pl.Squeezed(), pl.Squeezed(), 1, 128),
                               lambda b, c, l: (b, c, 0, 0)),      # resident across l
        scratch_shapes=[pltpu.VMEM((X_DIM, tile_l), jnp.float32)],
        compiler_params=pltpu.CompilerParams(
            dimension_semantics=("parallel", "parallel", "arbitrary"),
            vmem_limit_bytes=40 * 1024 * 1024),
        cost_estimate=cost,
    )(x_start, noise_valid, a, wxa, wxn, wa32, tb)

    per_batch = out[:, :, 0, 0].sum(axis=1)     # sum of per-chunk partial means = 'b ... -> b'
    return per_batch.mean()                     # final .mean()


# pure-JAX reference (full original padded path, f32; correctness check only)
def p_losses_ref(x_start, a, times, noise, wx, wa, temb):
    x_pad, pad = _inference_pad(x_start)
    a_pad, _ = _inference_pad(a)
    Lp = x_pad.shape[-1]
    log_snr = _cosine_log_snr(times)
    alpha = jnp.sqrt(jax.nn.sigmoid(log_snr))[:, None, None]
    sigma = jnp.sqrt(jax.nn.sigmoid(-log_snr))[:, None, None]
    x_noisy = alpha * x_pad + sigma * noise
    pred = (jnp.einsum("oc,bcl->bol", wx, x_noisy)
            + jnp.einsum("oc,bcl->bol", wa, a_pad)
            + temb[None] * log_snr[:, None, None])
    sl = slice(VALID_PAD, Lp - (VALID_PAD + pad))
    diff = pred[..., sl] - noise[..., sl]
    return jnp.mean(jnp.mean(diff ** 2, axis=(1, 2)))


def _padded_len(L):
    return (1 + (L + 2 * VALID_PAD) // 2 ** UNET_DEPTH) * 2 ** UNET_DEPTH


if __name__ == "__main__":
    key = jax.random.PRNGKey(0)
    kx, ka, kt, kn, kw1, kw2, kw3, k2x, k2a, k2t, k2n = jax.random.split(key, 11)

    # deterministic stand-in network parameters
    wx = 0.1 * jax.random.normal(kw1, (X_DIM, X_DIM), dtype=jnp.float32)
    wa = 0.1 * jax.random.normal(kw2, (X_DIM, A_DIM), dtype=jnp.float32)
    temb = 0.1 * jax.random.normal(kw3, (X_DIM, 1), dtype=jnp.float32)

    # --- check 1: tiny shapes (single tile / single chunk) ---
    B, L = 2, 16
    x = jax.random.normal(kx, (B, X_DIM, L), dtype=jnp.float32)
    a = jax.random.normal(ka, (B, A_DIM, L), dtype=jnp.float32)
    times = jax.random.uniform(kt, (B,), dtype=jnp.float32)              # sample_random_times
    noise = jax.random.normal(kn, (B, X_DIM, _padded_len(L)), dtype=jnp.float32)  # randn_like(x_pad)
    noise_valid = noise[:, :, VALID_PAD:VALID_PAD + L]

    loss = p_losses(x, a, times, noise_valid, wx, wa, temb)
    jax.block_until_ready(loss)
    ref = p_losses_ref(x, a, times, noise, wx, wa, temb)
    assert jnp.allclose(loss, ref, rtol=1e-2, atol=1e-4), (loss, ref)

    # --- check 2: exercise multi-tile + 2-chunk parallel split + masked partial tail ---
    B2, L2 = 1, 300
    x2 = jax.random.normal(k2x, (B2, X_DIM, L2), dtype=jnp.float32)
    a2 = jax.random.normal(k2a, (B2, A_DIM, L2), dtype=jnp.float32)
    times2 = jax.random.uniform(k2t, (B2,), dtype=jnp.float32)
    noise2 = jax.random.normal(k2n, (B2, X_DIM, _padded_len(L2)), dtype=jnp.float32)
    noise2_valid = noise2[:, :, VALID_PAD:VALID_PAD + L2]

    loss2 = p_losses(x2, a2, times2, noise2_valid, wx, wa, temb, max_tile_cols=128)
    jax.block_until_ready(loss2)
    ref2 = p_losses_ref(x2, a2, times2, noise2, wx, wa, temb)
    assert jnp.allclose(loss2, ref2, rtol=1e-2, atol=1e-4), (loss2, ref2)

    print("KERNEL_OK")
</pallas_src>

<mosaic_0001>
module attributes {stable_mosaic.version = 11 : i64} {
  func.func @_p_losses_kernel(%arg0: i32, %arg1: i32, %arg2: i32, %arg3: memref<1x4x16xf32, #tpu.memory_space<vmem>>, %arg4: memref<1x4x16xf32, #tpu.memory_space<vmem>>, %arg5: memref<1x40x16xf32, #tpu.memory_space<vmem>>, %arg6: memref<1x4x4xf32, #tpu.memory_space<vmem>>, %arg7: memref<1x4x4xf32, #tpu.memory_space<vmem>>, %arg8: memref<4x40xf32, #tpu.memory_space<vmem>>, %arg9: memref<1x4x1xf32, #tpu.memory_space<vmem>>, %arg10: memref<1x1x1x128xf32, #tpu.memory_space<vmem>>, %arg11: memref<4x16xf32, #tpu.memory_space<vmem>>) attributes {dimension_semantics = [#tpu.dimension_semantics<parallel>, #tpu.dimension_semantics<parallel>, #tpu.dimension_semantics<arbitrary>], iteration_bounds = array<i64: 2, 1, 1>, scalar_prefetch = 0 : i64, scratch_operands = 1 : i64, tpu.core_type = #tpu.core_type<tc>, window_params = [{transform_indices = @transform_0, window_bounds = array<i64: 1, 4, 16>}, {transform_indices = @transform_1, window_bounds = array<i64: 1, 4, 16>}, {transform_indices = @transform_2, window_bounds = array<i64: 1, 40, 16>}, {transform_indices = @transform_3, window_bounds = array<i64: 1, 4, 4>}, {transform_indices = @transform_4, window_bounds = array<i64: 1, 4, 4>}, {pipeline_mode = #tpu.pipeline_mode<synchronous>, transform_indices = @transform_5, window_bounds = array<i64: 4, 40>}, {transform_indices = @transform_6, window_bounds = array<i64: 1, 4, 1>}, {transform_indices = @transform_7, window_bounds = array<i64: 1, 1, 1, 128>}]} {
    %c0 = arith.constant 0 : index
    %c0_0 = arith.constant 0 : index
    %c0_1 = arith.constant 0 : index
    %0 = vector.load %arg3[%c0, %c0_0, %c0_1] : memref<1x4x16xf32, #tpu.memory_space<vmem>>, vector<1x4x16xf32>
    %1 = vector.shape_cast %0 : vector<1x4x16xf32> to vector<4x16xf32>
    %c0_2 = arith.constant 0 : index
    %c0_3 = arith.constant 0 : index
    %c0_4 = arith.constant 0 : index
    %2 = vector.load %arg4[%c0_2, %c0_3, %c0_4] : memref<1x4x16xf32, #tpu.memory_space<vmem>>, vector<1x4x16xf32>
    %3 = vector.shape_cast %2 : vector<1x4x16xf32> to vector<4x16xf32>
    %c0_5 = arith.constant 0 : index
    %c0_6 = arith.constant 0 : index
    %c0_7 = arith.constant 0 : index
    %4 = vector.load %arg5[%c0_5, %c0_6, %c0_7] : memref<1x40x16xf32, #tpu.memory_space<vmem>>, vector<1x40x16xf32>
    %5 = vector.shape_cast %4 : vector<1x40x16xf32> to vector<40x16xf32>
    %c0_8 = arith.constant 0 : index
    %c0_9 = arith.constant 0 : index
    %c0_10 = arith.constant 0 : index
    %6 = vector.load %arg6[%c0_8, %c0_9, %c0_10] : memref<1x4x4xf32, #tpu.memory_space<vmem>>, vector<1x4x4xf32>
    %7 = vector.shape_cast %6 : vector<1x4x4xf32> to vector<4x4xf32>
    %cst = arith.constant dense<0.000000e+00> : vector<4x16xf32>
    %8 = tpu.matmul %7, %1, %cst {dimension_numbers = #tpu.dot_dimension_numbers<[1], [0], [0], [1], [0, 0, 1, 1], [], []>} : vector<4x4xf32>, vector<4x16xf32>, vector<4x16xf32> -> vector<4x16xf32>
    %c0_11 = arith.constant 0 : index
    %c0_12 = arith.constant 0 : index
    %c0_13 = arith.constant 0 : index
    %9 = vector.load %arg7[%c0_11, %c0_12, %c0_13] : memref<1x4x4xf32, #tpu.memory_space<vmem>>, vector<1x4x4xf32>
    %10 = vector.shape_cast %9 : vector<1x4x4xf32> to vector<4x4xf32>
    %cst_14 = arith.constant dense<0.000000e+00> : vector<4x16xf32>
    %11 = tpu.matmul %10, %3, %cst_14 {dimension_numbers = #tpu.dot_dimension_numbers<[1], [0], [0], [1], [0, 0, 1, 1], [], []>} : vector<4x4xf32>, vector<4x16xf32>, vector<4x16xf32> -> vector<4x16xf32>
    %12 = arith.addf %8, %11 : vector<4x16xf32>
    %c0_15 = arith.constant 0 : index
    %c0_16 = arith.constant 0 : index
    %13 = vector.load %arg8[%c0_15, %c0_16] : memref<4x40xf32, #tpu.memory_space<vmem>>, vector<4x40xf32>
    %cst_17 = arith.constant dense<0.000000e+00> : vector<4x16xf32>
    %14 = tpu.matmul %13, %5, %cst_17 {dimension_numbers = #tpu.dot_dimension_numbers<[1], [0], [0], [1], [0, 0, 1, 1], [], []>} : vector<4x40xf32>, vector<40x16xf32>, vector<4x16xf32> -> vector<4x16xf32>
    %15 = arith.addf %12, %14 : vector<4x16xf32>
    %c0_18 = arith.constant 0 : index
    %c0_19 = arith.constant 0 : index
    %c0_20 = arith.constant 0 : index
    %16 = vector.load %arg9[%c0_18, %c0_19, %c0_20] : memref<1x4x1xf32, #tpu.memory_space<vmem>>, vector<1x4x1xf32>
    %17 = vector.shape_cast %16 : vector<1x4x1xf32> to vector<4x1xf32>
    %18 = vector.broadcast %17 : vector<4x1xf32> to vector<4x16xf32>
    %19 = arith.addf %15, %18 : vector<4x16xf32>
    %20 = arith.subf %19, %3 : vector<4x16xf32>
    %21 = tpu.iota {dimensions = array<i32: 1>} : vector<1x16xi32>
    %c1_i32 = arith.constant 1 : i32
    %22 = arith.muli %arg1, %c1_i32 : i32
    %23 = arith.addi %22, %arg2 : i32
    %c16_i32 = arith.constant 16 : i32
    %24 = arith.muli %23, %c16_i32 : i32
    %25 = vector.broadcast %24 : i32 to vector<1x16xi32>
    %26 = arith.addi %21, %25 : vector<1x16xi32>
    %c16_i32_21 = arith.constant 16 : i32
    %27 = vector.broadcast %c16_i32_21 : i32 to vector<1x16xi32>
    %28 = arith.cmpi slt, %26, %27 : vector<1x16xi32>
    %29 = arith.mulf %20, %20 : vector<4x16xf32>
    %cst_22 = arith.constant 0.000000e+00 : f32
    %30 = vector.shape_cast %28 : vector<1x16xi1> to vector<1x16xi1>
    %31 = vector.broadcast %30 : vector<1x16xi1> to vector<4x16xi1>
    %32 = vector.broadcast %cst_22 : f32 to vector<4x16xf32>
    %33 = arith.select %31, %29, %32 : vector<4x16xi1>, vector<4x16xf32>
    %c0_i32 = arith.constant 0 : i32
    %34 = arith.cmpi eq, %arg2, %c0_i32 : i32
    %35 = arith.extui %34 : i1 to i32
    %c0_i32_23 = arith.constant 0 : i32
    %36 = arith.cmpi ne, %35, %c0_i32_23 : i32
    scf.if %36 {
      %c0_28 = arith.constant 0 : index
      %c0_29 = arith.constant 0 : index
      %43 = vector.load %arg11[%c0_28, %c0_29] : memref<4x16xf32, #tpu.memory_space<vmem>>, vector<4x16xf32>
      tpu.vector_store %arg11[%c0_28, %c0_29], %33 {strides = array<i32>} : memref<4x16xf32, #tpu.memory_space<vmem>>, vector<4x16xf32>,
    } else {
    }
    %c0_i32_24 = arith.constant 0 : i32
    %37 = arith.cmpi ne, %arg2, %c0_i32_24 : i32
    %38 = arith.extui %37 : i1 to i32
    %c0_i32_25 = arith.constant 0 : i32
    %39 = arith.cmpi ne, %38, %c0_i32_25 : i32
    scf.if %39 {
      %c0_28 = arith.constant 0 : index
      %c0_29 = arith.constant 0 : index
      %43 = vector.load %arg11[%c0_28, %c0_29] : memref<4x16xf32, #tpu.memory_space<vmem>>, vector<4x16xf32>
      %44 = arith.addf %43, %33 : vector<4x16xf32>
      %c0_30 = arith.constant 0 : index
      %c0_31 = arith.constant 0 : index
      %45 = vector.load %arg11[%c0_30, %c0_31] : memref<4x16xf32, #tpu.memory_space<vmem>>, vector<4x16xf32>
      tpu.vector_store %arg11[%c0_30, %c0_31], %44 {strides = array<i32>} : memref<4x16xf32, #tpu.memory_space<vmem>>, vector<4x16xf32>,
    } else {
    }
    %c0_i32_26 = arith.constant 0 : i32
    %40 = arith.cmpi eq, %arg2, %c0_i32_26 : i32
    %41 = arith.extui %40 : i1 to i32
    %c0_i32_27 = arith.constant 0 : i32
    %42 = arith.cmpi ne, %41, %c0_i32_27 : i32
    scf.if %42 {
      %c0_28 = arith.constant 0 : index
      %c0_29 = arith.constant 0 : index
      %43 = vector.load %arg11[%c0_28, %c0_29] : memref<4x16xf32, #tpu.memory_space<vmem>>, vector<4x16xf32>
      %44 = vector.shape_cast %43 : vector<4x16xf32> to vector<1x4x16xf32>
      %cst_30 = arith.constant dense<0.000000e+00> : vector<1xf32>
      %45 = vector.multi_reduction <add>, %44, %cst_30 [1, 2] : vector<1x4x16xf32> to vector<1xf32>
      %46 = vector.shape_cast %45 : vector<1xf32> to vector<1x1x1xf32>
      %47 = vector.extract %46[0, 0, 0] : f32 from vector<1x1x1xf32>
      %cst_31 = arith.constant 1.562500e-02 : f32
      %48 = arith.mulf %47, %cst_31 : f32
      %49 = vector.broadcast %48 : f32 to vector<1x128xf32>
      %c0_32 = arith.constant 0 : index
      %c0_33 = arith.constant 0 : index
      %c0_34 = arith.constant 0 : index
      %c0_35 = arith.constant 0 : index
      %50 = vector.load %arg10[%c0_32, %c0_33, %c0_34, %c0_35] : memref<1x1x1x128xf32, #tpu.memory_space<vmem>>, vector<1x1x1x128xf32>
      %51 = vector.shape_cast %50 : vector<1x1x1x128xf32> to vector<1x128xf32>
      %52 = vector.shape_cast %49 : vector<1x128xf32> to vector<1x1x1x128xf32>
      tpu.vector_store %arg10[%c0_32, %c0_33, %c0_34, %c0_35], %52 {strides = array<i32>} : memref<1x1x1x128xf32, #tpu.memory_space<vmem>>, vector<1x1x1x128xf32>,
    } else {
    }
    return
  }
  func.func @transform_0(%arg0: i32, %arg1: i32, %arg2: i32) -> (i32, i32, i32) {
    %c1_i32 = arith.constant 1 : i32
    %0 = arith.muli %arg1, %c1_i32 : i32
    %1 = arith.addi %0, %arg2 : i32
    %c0_i32 = arith.constant 0 : i32
    %2 = arith.minsi %1, %c0_i32 : i32
    %c0_i32_0 = arith.constant 0 : i32
    %c0_i32_1 = arith.constant 0 : i32
    return %arg0, %c0_i32_0, %2 : i32, i32, i32
  }
  func.func @transform_1(%arg0: i32, %arg1: i32, %arg2: i32) -> (i32, i32, i32) {
    %c1_i32 = arith.constant 1 : i32
    %0 = arith.muli %arg1, %c1_i32 : i32
    %1 = arith.addi %0, %arg2 : i32
    %c0_i32 = arith.constant 0 : i32
    %2 = arith.minsi %1, %c0_i32 : i32
    %c0_i32_0 = arith.constant 0 : i32
    %c0_i32_1 = arith.constant 0 : i32
    return %arg0, %c0_i32_0, %2 : i32, i32, i32
  }
  func.func @transform_2(%arg0: i32, %arg1: i32, %arg2: i32) -> (i32, i32, i32) {
    %c1_i32 = arith.constant 1 : i32
    %0 = arith.muli %arg1, %c1_i32 : i32
    %1 = arith.addi %0, %arg2 : i32
    %c0_i32 = arith.constant 0 : i32
    %2 = arith.minsi %1, %c0_i32 : i32
    %c0_i32_0 = arith.constant 0 : i32
    %c0_i32_1 = arith.constant 0 : i32
    return %arg0, %c0_i32_0, %2 : i32, i32, i32
  }
  func.func @transform_3(%arg0: i32, %arg1: i32, %arg2: i32) -> (i32, i32, i32) {
    %c0_i32 = arith.constant 0 : i32
    %c0_i32_0 = arith.constant 0 : i32
    %c0_i32_1 = arith.constant 0 : i32
    return %arg0, %c0_i32, %c0_i32_0 : i32, i32, i32
  }
  func.func @transform_4(%arg0: i32, %arg1: i32, %arg2: i32) -> (i32, i32, i32) {
    %c0_i32 = arith.constant 0 : i32
    %c0_i32_0 = arith.constant 0 : i32
    %c0_i32_1 = arith.constant 0 : i32
    return %arg0, %c0_i32, %c0_i32_0 : i32, i32, i32
  }
  func.func @transform_5(%arg0: i32, %arg1: i32, %arg2: i32) -> (i32, i32) {
    %c0_i32 = arith.constant 0 : i32
    %c0_i32_0 = arith.constant 0 : i32
    %c0_i32_1 = arith.constant 0 : i32
    return %c0_i32, %c0_i32_0 : i32, i32
  }
  func.func @transform_6(%arg0: i32, %arg1: i32, %arg2: i32) -> (i32, i32, i32) {
    %c0_i32 = arith.constant 0 : i32
    %c0_i32_0 = arith.constant 0 : i32
    %c0_i32_1 = arith.constant 0 : i32
    return %arg0, %c0_i32, %c0_i32_0 : i32, i32, i32
  }
  func.func @transform_7(%arg0: i32, %arg1: i32, %arg2: i32) -> (i32, i32, i32, i32) {
    %c0_i32 = arith.constant 0 : i32
    %c0_i32_0 = arith.constant 0 : i32
    %c0_i32_1 = arith.constant 0 : i32
    return %arg0, %arg1, %c0_i32, %c0_i32_0 : i32, i32, i32, i32
  }
}

</mosaic_0001>

<llo_original>
// kernel: tpu_custom_call.1
$region0: #{tpu_custom_call.1}
  #allocation0 [shape = 'u32[]', space=smem, size = 0x4, offset = 0x4, fixed_abs, tag = 'smem constant byte address 0x4 - core index']
  #allocation1 [shape = 'u32[144,128]{1,0:T(1,128)}', space=vmem, size = 0x12000, scoped, tag = 'internal scratch']
  #allocation2 [shape = 'f32[4,16]{1,0:T(4,128)}', space=vmem, size = 0x800, scoped, tag = 'scratch operand']
  %s0 = inlined_call_operand.vmem [shape: f32[2,4,16], index: 0, kind: input, shape index: {}]
  %s1 = inlined_call_operand.vmem [shape: f32[2,4,16], index: 1, kind: input, shape index: {}]
  %s2 = inlined_call_operand.vmem [shape: f32[2,40,16], index: 2, kind: input, shape index: {}]
  %s3 = inlined_call_operand.vmem [shape: f32[2,4,4], index: 3, kind: input, shape index: {}]
  %s4 = inlined_call_operand.vmem [shape: f32[2,4,4], index: 4, kind: input, shape index: {}]
  %s5 = inlined_call_operand.vmem [shape: f32[4,40], index: 5, kind: input, shape index: {}]
  %s6 = inlined_call_operand.vmem [shape: f32[2,4,1], index: 6, kind: input, shape index: {}]
  %s7 = inlined_call_operand.hbm [shape: f32[2,1,1,128], index: 7, kind: output, shape index: {}]
  %s8 = sld [smem:[#allocation0]]
  $region73: #{tpu_custom_call.1} parent=0
    _
  %s10 = ssub.s32 1, %s8
  %s11 = scalar_select 0, %s10, %s8
  $region1: #{tpu_custom_call.1} parent=0
    #allocation3 [shape = 'u8[1024]{0}', space=vmem, size = 0x400, scoped, tag = 'output window, operand 0']
    #allocation4 [shape = 's32[2]{0}', space=sflag, size = 0x8, scoped, tag = 'scoped memory for tpu_custom_call.1']
    %12 = vsyncpa [#allocation4], 0
    %s13 = scalar_lea.sflag [#allocation4], 1
    %14 = vsyncpa %s13, 0
    loop: start=0, step=1, limit=4
    $region2: #{tpu_custom_call.1} parent=1 // loop_pre_header
      _
    $region3: #{tpu_custom_call.1} parent=1 // loop_header
      %s16 = sphi 0, %s20
      %p17 = scmp.ge.s32.totalorder %s16, 4
      %s23 = sphi 0, %s42
      %s24 = sphi 0, %s38
      %s25 = sphi 0, %s34
      %s26 = sphi 0, %s23
      %s27 = sphi 0, %s24
      %s28 = sphi 0, %s25
      %s29 = sphi 0, %s26
      %s30 = sphi 0, %s27
      %s31 = sphi 0, %s28
      %s53 = sphi 0, %s55
      %s56 = sphi 0, %s53
      %s57 = sphi 0, %s56
      %s73 = sphi 0, %s57
      %s87 = sphi 0, %s89
      %s90 = sphi 0, %s87
      %s91 = sphi 0, %s90
      %s107 = sphi 0, %s91
      %s121 = sphi 0, %s123
      %s124 = sphi 0, %s121
      %s125 = sphi 0, %s124
      %s141 = sphi 0, %s125
      %s147 = sphi 0, %s149
      %s150 = sphi 0, %s147
      %s151 = sphi 0, %s150
      %s167 = sphi 0, %s151
      %s173 = sphi 0, %s175
      %s176 = sphi 0, %s173
      %s177 = sphi 0, %s176
      %s193 = sphi 0, %s177
      %s197 = sphi 0, %s197
      %s199 = sphi 0, %s197
      %s200 = sphi 0, %s199
      %s214 = sphi 0, %s200
      %s220 = sphi 0, %s222
      %s223 = sphi 0, %s220
      %s224 = sphi 0, %s223
      %s240 = sphi 0, %s224
      %s248 = sphi 0, %s250
      %s251 = sphi 0, %s248
      %s252 = sphi 0, %s251
      %s268 = sphi 0, %s252
    $region4: #{tpu_custom_call.1} parent=1 // loop_header_branch
      %19 = sbr.rel (%p17) target = $region8
    $region5: #{tpu_custom_call.1} parent=1 // loop_body
      %s21 = ssub.s32 %s16, 1
      %s22 = ssub.s32 %s16, 2
      %s32 = sadd.s32 1, %s25
      %p33 = scmp.ge.s32.totalorder %s32, 1
      %s34 = scalar_select %p33, 0, %s32
      %s35 = sadd.s32 1, %s24
      %s36 = scalar_select %p33, %s35, %s24
      %p37 = scmp.ge.s32.totalorder %s36, 1
      %s38 = scalar_select %p37, 0, %s36
      %s39 = sadd.s32 1, %s23
      %s40 = scalar_select %p37, %s39, %s23
      %p41 = scmp.ge.s32.totalorder %s40, 2
      %s42 = scalar_select %p41, 0, %s40
      %s43 = sadd.s32 %s24, %s25
      %p44 = scmp.lt.s32.totalorder %s43, 0
      %s45 = scalar_select %p44, %s43, 0
      %s46 = sadd.s32 %s38, %s34
      %p47 = scmp.lt.s32.totalorder %s46, 0
      %s48 = scalar_select %p47, %s46, 0
      %s49 = ssub.s32 %s23, %s42
      %s50 = ssub.s32 %s45, %s48
      %s51 = sor.u32 %s49, %s50
      %p52 = scmp.eq.s32.totalorder %s51, 0
      %s54 = sadd.s32 %s53, 1
      %s55 = scalar_select %p52, %s53, %s54
      %p58 = pneg %p52
      %p59 = scmp.eq.s32.totalorder %s16, 1
      %p60 = por %p58, %p59
      %p61 = scmp.ne.s32.totalorder %s53, %s56
      %p62 = scmp.eq.s32.totalorder %s16, 0
      %p63 = por %p61, %p62
      %p64 = scmp.ne.s32.totalorder %s53, %s56
      %p65 = scmp.eq.s32.totalorder %s21, 1
      %p66 = por %p64, %p65
      %p67 = scmp.ne.s32.totalorder %s56, %s57
      %p68 = scmp.eq.s32.totalorder %s21, 0
      %p69 = por %p67, %p68
      %p70 = scmp.ne.s32.totalorder %s56, %s57
      %p71 = scmp.eq.s32.totalorder %s22, 1
      %p72 = por %p70, %p71
      %p74 = scmp.ne.s32.totalorder %s57, %s73
      %p75 = scmp.eq.s32.totalorder %s22, 0
      %p76 = por %p74, %p75
      %s77 = sadd.s32 %s24, %s25
      %p78 = scmp.lt.s32.totalorder %s77, 0
      %s79 = scalar_select %p78, %s77, 0
      %s80 = sadd.s32 %s38, %s34
      %p81 = scmp.lt.s32.totalorder %s80, 0
      %s82 = scalar_select %p81, %s80, 0
      %s83 = ssub.s32 %s23, %s42
      %s84 = ssub.s32 %s79, %s82
      %s85 = sor.u32 %s83, %s84
      %p86 = scmp.eq.s32.totalorder %s85, 0
      %s88 = sadd.s32 %s87, 1
      %s89 = scalar_select %p86, %s87, %s88
      %p92 = pneg %p86
      %p93 = scmp.eq.s32.totalorder %s16, 1
      %p94 = por %p92, %p93
      %p95 = scmp.ne.s32.totalorder %s87, %s90
      %p96 = scmp.eq.s32.totalorder %s16, 0
      %p97 = por %p95, %p96
      %p98 = scmp.ne.s32.totalorder %s87, %s90
      %p99 = scmp.eq.s32.totalorder %s21, 1
      %p100 = por %p98, %p99
      %p101 = scmp.ne.s32.totalorder %s90, %s91
      %p102 = scmp.eq.s32.totalorder %s21, 0
      %p103 = por %p101, %p102
      %p104 = scmp.ne.s32.totalorder %s90, %s91
      %p105 = scmp.eq.s32.totalorder %s22, 1
      %p106 = por %p104, %p105
      %p108 = scmp.ne.s32.totalorder %s91, %s107
      %p109 = scmp.eq.s32.totalorder %s22, 0
      %p110 = por %p108, %p109
      %s111 = sadd.s32 %s24, %s25
      %p112 = scmp.lt.s32.totalorder %s111, 0
      %s113 = scalar_select %p112, %s111, 0
      %s114 = sadd.s32 %s38, %s34
      %p115 = scmp.lt.s32.totalorder %s114, 0
      %s116 = scalar_select %p115, %s114, 0
      %s117 = ssub.s32 %s23, %s42
      %s118 = ssub.s32 %s113, %s116
      %s119 = sor.u32 %s117, %s118
      %p120 = scmp.eq.s32.totalorder %s119, 0
      %s122 = sadd.s32 %s121, 1
      %s123 = scalar_select %p120, %s121, %s122
      %p126 = pneg %p120
      %p127 = scmp.eq.s32.totalorder %s16, 1
      %p128 = por %p126, %p127
      %p129 = scmp.ne.s32.totalorder %s121, %s124
      %p130 = scmp.eq.s32.totalorder %s16, 0
      %p131 = por %p129, %p130
      %p132 = scmp.ne.s32.totalorder %s121, %s124
      %p133 = scmp.eq.s32.totalorder %s21, 1
      %p134 = por %p132, %p133
      %p135 = scmp.ne.s32.totalorder %s124, %s125
      %p136 = scmp.eq.s32.totalorder %s21, 0
      %p137 = por %p135, %p136
      %p138 = scmp.ne.s32.totalorder %s124, %s125
      %p139 = scmp.eq.s32.totalorder %s22, 1
      %p140 = por %p138, %p139
      %p142 = scmp.ne.s32.totalorder %s125, %s141
      %p143 = scmp.eq.s32.totalorder %s22, 0
      %p144 = por %p142, %p143
      %s145 = ssub.s32 %s23, %s42
      %p146 = scmp.eq.s32.totalorder %s145, 0
      %s148 = sadd.s32 %s147, 1
      %s149 = scalar_select %p146, %s147, %s148
      %p152 = pneg %p146
      %p153 = scmp.eq.s32.totalorder %s16, 1
      %p154 = por %p152, %p153
      %p155 = scmp.ne.s32.totalorder %s147, %s150
      %p156 = scmp.eq.s32.totalorder %s16, 0
      %p157 = por %p155, %p156
      %p158 = scmp.ne.s32.totalorder %s147, %s150
      %p159 = scmp.eq.s32.totalorder %s21, 1
      %p160 = por %p158, %p159
      %p161 = scmp.ne.s32.totalorder %s150, %s151
      %p162 = scmp.eq.s32.totalorder %s21, 0
      %p163 = por %p161, %p162
      %p164 = scmp.ne.s32.totalorder %s150, %s151
      %p165 = scmp.eq.s32.totalorder %s22, 1
      %p166 = por %p164, %p165
      %p168 = scmp.ne.s32.totalorder %s151, %s167
      %p169 = scmp.eq.s32.totalorder %s22, 0
      %p170 = por %p168, %p169
      %s171 = ssub.s32 %s23, %s42
      %p172 = scmp.eq.s32.totalorder %s171, 0
      %s174 = sadd.s32 %s173, 1
      %s175 = scalar_select %p172, %s173, %s174
      %p178 = pneg %p172
      %p179 = scmp.eq.s32.totalorder %s16, 1
      %p180 = por %p178, %p179
      %p181 = scmp.ne.s32.totalorder %s173, %s176
      %p182 = scmp.eq.s32.totalorder %s16, 0
      %p183 = por %p181, %p182
      %p184 = scmp.ne.s32.totalorder %s173, %s176
      %p185 = scmp.eq.s32.totalorder %s21, 1
      %p186 = por %p184, %p185
      %p187 = scmp.ne.s32.totalorder %s176, %s177
      %p188 = scmp.eq.s32.totalorder %s21, 0
      %p189 = por %p187, %p188
      %p190 = scmp.ne.s32.totalorder %s176, %s177
      %p191 = scmp.eq.s32.totalorder %s22, 1
      %p192 = por %p190, %p191
      %p194 = scmp.ne.s32.totalorder %s177, %s193
      %p195 = scmp.eq.s32.totalorder %s22, 0
      %p196 = por %p194, %p195
      %s198 = sadd.s32 %s197, 1
      %p201 = scmp.eq.s32.totalorder %s16, 1
      %p202 = scmp.ne.s32.totalorder %s197, %s199
      %p203 = scmp.eq.s32.totalorder %s16, 0
      %p204 = por %p202, %p203
      %p205 = scmp.ne.s32.totalorder %s197, %s199
      %p206 = scmp.eq.s32.totalorder %s21, 1
      %p207 = por %p205, %p206
      %p208 = scmp.ne.s32.totalorder %s199, %s200
      %p209 = scmp.eq.s32.totalorder %s21, 0
      %p210 = por %p208, %p209
      %p211 = scmp.ne.s32.totalorder %s199, %s200
      %p212 = scmp.eq.s32.totalorder %s22, 1
      %p213 = por %p211, %p212
      %p215 = scmp.ne.s32.totalorder %s200, %s214
      %p216 = scmp.eq.s32.totalorder %s22, 0
      %p217 = por %p215, %p216
      %s218 = ssub.s32 %s23, %s42
      %p219 = scmp.eq.s32.totalorder %s218, 0
      %s221 = sadd.s32 %s220, 1
      %s222 = scalar_select %p219, %s220, %s221
      %p225 = pneg %p219
      %p226 = scmp.eq.s32.totalorder %s16, 1
      %p227 = por %p225, %p226
      %p228 = scmp.ne.s32.totalorder %s220, %s223
      %p229 = scmp.eq.s32.totalorder %s16, 0
      %p230 = por %p228, %p229
      %p231 = scmp.ne.s32.totalorder %s220, %s223
      %p232 = scmp.eq.s32.totalorder %s21, 1
      %p233 = por %p231, %p232
      %p234 = scmp.ne.s32.totalorder %s223, %s224
      %p235 = scmp.eq.s32.totalorder %s21, 0
      %p236 = por %p234, %p235
      %p237 = scmp.ne.s32.totalorder %s223, %s224
      %p238 = scmp.eq.s32.totalorder %s22, 1
      %p239 = por %p237, %p238
      %p241 = scmp.ne.s32.totalorder %s224, %s240
      %p242 = scmp.eq.s32.totalorder %s22, 0
      %p243 = por %p241, %p242
      %s244 = ssub.s32 %s23, %s42
      %s245 = ssub.s32 %s24, %s38
      %s246 = sor.u32 %s244, %s245
      %p247 = scmp.eq.s32.totalorder %s246, 0
      %s249 = sadd.s32 %s248, 1
      %s250 = scalar_select %p247, %s248, %s249
      %p253 = pneg %p247
      %p254 = scmp.eq.s32.totalorder %s16, 1
      %p255 = por %p253, %p254
      %p256 = scmp.ne.s32.totalorder %s248, %s251
      %p257 = scmp.eq.s32.totalorder %s16, 0
      %p258 = por %p256, %p257
      %p259 = scmp.ne.s32.totalorder %s248, %s251
      %p260 = scmp.eq.s32.totalorder %s21, 1
      %p261 = por %p259, %p260
      %p262 = scmp.ne.s32.totalorder %s251, %s252
      %p263 = scmp.eq.s32.totalorder %s21, 0
      %p264 = por %p262, %p263
      %p265 = scmp.ne.s32.totalorder %s251, %s252
      %p266 = scmp.eq.s32.totalorder %s22, 1
      %p267 = por %p265, %p266
      %p269 = scmp.ne.s32.totalorder %s252, %s268
      %p270 = scmp.eq.s32.totalorder %s22, 0
      %p271 = por %p269, %p270
      %p272 = scmp.le.s32.totalorder 1, %s16
      %p273 = scmp.lt.s32.totalorder %s16, 3
      %p274 = pnand %p272, %p273
      %p275 = pneg %p274
      // Predicated region
      $region9: #{tpu_custom_call.1} parent=5 // pred_check
        _
      $region10: #{tpu_custom_call.1} parent=5 // pred_check_branch
        %277 = sbr.rel (%p274) target = $region12
      $region11: #{tpu_custom_call.1} parent=5 // pred_region
        %s278 = ssub.s32 %s16, 1
        // Predicated region
        $region13: #{tpu_custom_call.1} parent=11 // pred_check
          %p279 = pneg %p210
        $region14: #{tpu_custom_call.1} parent=11 // pred_check_branch
          %281 = sbr.rel (%p279) target = $region16
        $region15: #{tpu_custom_call.1} parent=11 // pred_region
          _
        $region16: #{tpu_custom_call.1} parent=11 // pred_fallthru
          _
      $region12: #{tpu_custom_call.1} parent=5 // pred_fallthru
        _
      %p282 = scmp.lt.s32.totalorder %s16, 2
      // Predicated region
      $region17: #{tpu_custom_call.1} parent=5 // pred_check
        %p283 = pneg %p282
      $region18: #{tpu_custom_call.1} parent=5 // pred_check_branch
        %285 = sbr.rel (%p283) target = $region20
      $region19: #{tpu_custom_call.1} parent=5 // pred_region
        // Predicated region
        $region21: #{tpu_custom_call.1} parent=19 // pred_check
          %p286 = pneg %p63
        $region22: #{tpu_custom_call.1} parent=19 // pred_check_branch
          %288 = sbr.rel (%p286) target = $region24
        $region23: #{tpu_custom_call.1} parent=19 // pred_region
          %s289 = sadd.s32 %s24, %s25
          %p290 = scmp.lt.s32.totalorder %s289, 0
          %s291 = scalar_select %p290, %s289, 0
          %p292 = scmp.lt.s32.totalorder %s23, 1
          %s293 = scalar_select %p292, %s23, 1
          %p294 = scmp.lt.s32.totalorder %s291, 0
          %s295 = scalar_select %p294, %s291, 0
          %s296 = sadd.s32 %s295, %s293
          %s297 = smul.addr %s296, 4
          %s298 = scalar_lea.vmem %s0, %s297
          %s299 = sadd.s32 %s24, %s25
          %p300 = scmp.lt.s32.totalorder %s299, 0
          %s301 = scalar_select %p300, %s299, 0
        $region24: #{tpu_custom_call.1} parent=19 // pred_fallthru
          _
        // Predicated region
        $region25: #{tpu_custom_call.1} parent=19 // pred_check
          %p302 = pneg %p97
        $region26: #{tpu_custom_call.1} parent=19 // pred_check_branch
          %304 = sbr.rel (%p302) target = $region28
        $region27: #{tpu_custom_call.1} parent=19 // pred_region
          %s305 = sadd.s32 %s24, %s25
          %p306 = scmp.lt.s32.totalorder %s305, 0
          %s307 = scalar_select %p306, %s305, 0
          %p308 = scmp.lt.s32.totalorder %s23, 1
          %s309 = scalar_select %p308, %s23, 1
          %p310 = scmp.lt.s32.totalorder %s307, 0
          %s311 = scalar_select %p310, %s307, 0
          %s312 = sadd.s32 %s311, %s309
          %s313 = smul.addr %s312, 4
          %s314 = scalar_lea.vmem %s1, %s313
          %s315 = sadd.s32 %s24, %s25
          %p316 = scmp.lt.s32.totalorder %s315, 0
          %s317 = scalar_select %p316, %s315, 0
        $region28: #{tpu_custom_call.1} parent=19 // pred_fallthru
          _
        // Predicated region
        $region29: #{tpu_custom_call.1} parent=19 // pred_check
          %p318 = pneg %p131
        $region30: #{tpu_custom_call.1} parent=19 // pred_check_branch
          %320 = sbr.rel (%p318) target = $region32
        $region31: #{tpu_custom_call.1} parent=19 // pred_region
          %s321 = sadd.s32 %s24, %s25
          %p322 = scmp.lt.s32.totalorder %s321, 0
          %s323 = scalar_select %p322, %s321, 0
          %p324 = scmp.lt.s32.totalorder %s23, 1
          %s325 = scalar_select %p324, %s23, 1
          %p326 = scmp.lt.s32.totalorder %s323, 0
          %s327 = scalar_select %p326, %s323, 0
          %s328 = smul.addr %s325, 5
          %s329 = sadd.s32 %s327, %s328
          %s330 = smul.addr %s329, 8
          %s331 = scalar_lea.vmem %s2, %s330
          %s332 = sadd.s32 %s24, %s25
          %p333 = scmp.lt.s32.totalorder %s332, 0
          %s334 = scalar_select %p333, %s332, 0
        $region32: #{tpu_custom_call.1} parent=19 // pred_fallthru
          _
        // Predicated region
        $region33: #{tpu_custom_call.1} parent=19 // pred_check
          %p335 = pneg %p157
        $region34: #{tpu_custom_call.1} parent=19 // pred_check_branch
          %337 = sbr.rel (%p335) target = $region36
        $region35: #{tpu_custom_call.1} parent=19 // pred_region
          %p338 = scmp.lt.s32.totalorder %s23, 1
          %s339 = scalar_select %p338, %s23, 1
          %s340 = smul.addr %s339, 4
          %s341 = scalar_lea.vmem %s3, %s340
        $region36: #{tpu_custom_call.1} parent=19 // pred_fallthru
          _
        // Predicated region
        $region37: #{tpu_custom_call.1} parent=19 // pred_check
          %p342 = pneg %p183
        $region38: #{tpu_custom_call.1} parent=19 // pred_check_branch
          %344 = sbr.rel (%p342) target = $region40
        $region39: #{tpu_custom_call.1} parent=19 // pred_region
          %p345 = scmp.lt.s32.totalorder %s23, 1
          %s346 = scalar_select %p345, %s23, 1
          %s347 = smul.addr %s346, 4
          %s348 = scalar_lea.vmem %s4, %s347
        $region40: #{tpu_custom_call.1} parent=19 // pred_fallthru
          _
        // Predicated region
        $region41: #{tpu_custom_call.1} parent=19 // pred_check
          %p349 = pneg %p230
        $region42: #{tpu_custom_call.1} parent=19 // pred_check_branch
          %351 = sbr.rel (%p349) target = $region44
        $region43: #{tpu_custom_call.1} parent=19 // pred_region
          %p352 = scmp.lt.s32.totalorder %s23, 1
          %s353 = scalar_select %p352, %s23, 1
          %s354 = smul.addr %s353, 4
          %s355 = scalar_lea.vmem %s6, %s354
        $region44: #{tpu_custom_call.1} parent=19 // pred_fallthru
          _
      $region20: #{tpu_custom_call.1} parent=5 // pred_fallthru
        _
      %p356 = scmp.le.s32.totalorder 1, %s16
      %p357 = scmp.lt.s32.totalorder %s16, 3
      %p358 = pnand %p356, %p357
      %p359 = pneg %p358
      // Predicated region
      $region45: #{tpu_custom_call.1} parent=5 // pred_check
        _
      $region46: #{tpu_custom_call.1} parent=5 // pred_check_branch
        %361 = sbr.rel (%p358) target = $region48
      $region47: #{tpu_custom_call.1} parent=5 // pred_region
        %s362 = ssub.s32 %s16, 1
        %s363 = sadd.s32 %s27, %s28
        %p364 = scmp.lt.s32.totalorder %s363, 0
        %s365 = scalar_select %p364, %s363, 0
        %p366 = scmp.lt.s32.totalorder %s26, 1
        %s367 = scalar_select %p366, %s26, 1
        %p368 = scmp.lt.s32.totalorder %s365, 0
        %s369 = scalar_select %p368, %s365, 0
        %s370 = sadd.s32 %s369, %s367
        %s371 = smul.addr %s370, 4
        %s372 = scalar_lea.vmem %s0, %s371
        %p373 = pneg %p69
        %p374 = pneg %p66
        %s375 = sadd.s32 %s27, %s28
        %p376 = scmp.lt.s32.totalorder %s375, 0
        %s377 = scalar_select %p376, %s375, 0
        %p378 = scmp.lt.s32.totalorder %s26, 1
        %s379 = scalar_select %p378, %s26, 1
        %p380 = scmp.lt.s32.totalorder %s377, 0
        %s381 = scalar_select %p380, %s377, 0
        %s382 = sadd.s32 %s381, %s379
        %s383 = smul.addr %s382, 4
        %s384 = scalar_lea.vmem %s1, %s383
        %p385 = pneg %p103
        %p386 = pneg %p100
        %s387 = sadd.s32 %s27, %s28
        %p388 = scmp.lt.s32.totalorder %s387, 0
        %s389 = scalar_select %p388, %s387, 0
        %p390 = scmp.lt.s32.totalorder %s26, 1
        %s391 = scalar_select %p390, %s26, 1
        %p392 = scmp.lt.s32.totalorder %s389, 0
        %s393 = scalar_select %p392, %s389, 0
        %s394 = smul.addr %s391, 5
        %s395 = sadd.s32 %s393, %s394
        %s396 = smul.addr %s395, 8
        %s397 = scalar_lea.vmem %s2, %s396
        %p398 = pneg %p137
        %p399 = pneg %p134
        %p400 = scmp.lt.s32.totalorder %s26, 1
        %s401 = scalar_select %p400, %s26, 1
        %s402 = smul.addr %s401, 4
        %s403 = scalar_lea.vmem %s3, %s402
        %p404 = pneg %p163
        %p405 = pneg %p160
        %p406 = scmp.lt.s32.totalorder %s26, 1
        %s407 = scalar_select %p406, %s26, 1
        %s408 = smul.addr %s407, 4
        %s409 = scalar_lea.vmem %s4, %s408
        %p410 = pneg %p189
        %p411 = pneg %p186
        %p412 = pneg %p210
        %p413 = pneg %p207
        %p414 = scmp.lt.s32.totalorder %s26, 1
        %s415 = scalar_select %p414, %s26, 1
        %s416 = smul.addr %s415, 4
        %s417 = scalar_lea.vmem %s6, %s416
        %p418 = pneg %p236
        %p419 = pneg %p233
        %p420 = pneg %p264
        %p421 = pneg %p261
        %s422 = sand.u32 %s251, 1
        %s423 = scalar_lea.sflag [#allocation4], %s422
        %s424 = sand.u32 %s251, 1
        %s425 = scalar_lea.vmem [#allocation3], %s424
        %s426 = sadd.s32 %s27, %s28
        %p427 = scmp.lt.s32.totalorder %s426, 0
        %s428 = scalar_select %p427, %s426, 0
        %p429 = scmp.lt.s32.totalorder %s26, 1
        %s430 = scalar_select %p429, %s26, 1
        %p431 = scmp.lt.s32.totalorder %s428, 0
        %s432 = scalar_select %p431, %s428, 0
        %s433 = sadd.s32 %s432, %s430
        %s434 = smul.addr %s433, 4
        %s435 = scalar_lea.vmem %s0, %s434
        %s436 = sadd.s32 %s27, %s28
        %p437 = scmp.lt.s32.totalorder %s436, 0
        %s438 = scalar_select %p437, %s436, 0
        %s439 = sadd.s32 %s27, %s28
        %p440 = scmp.lt.s32.totalorder %s439, 0
        %s441 = scalar_select %p440, %s439, 0
        %p442 = scmp.lt.s32.totalorder %s26, 1
        %s443 = scalar_select %p442, %s26, 1
        %p444 = scmp.lt.s32.totalorder %s441, 0
        %s445 = scalar_select %p444, %s441, 0
        %s446 = sadd.s32 %s445, %s443
        %s447 = smul.addr %s446, 4
        %s448 = scalar_lea.vmem %s1, %s447
        %s449 = sadd.s32 %s27, %s28
        %p450 = scmp.lt.s32.totalorder %s449, 0
        %s451 = scalar_select %p450, %s449, 0
        %s452 = sadd.s32 %s27, %s28
        %p453 = scmp.lt.s32.totalorder %s452, 0
        %s454 = scalar_select %p453, %s452, 0
        %p455 = scmp.lt.s32.totalorder %s26, 1
        %s456 = scalar_select %p455, %s26, 1
        %p457 = scmp.lt.s32.totalorder %s454, 0
        %s458 = scalar_select %p457, %s454, 0
        %s459 = smul.addr %s456, 5
        %s460 = sadd.s32 %s458, %s459
        %s461 = smul.addr %s460, 8
        %s462 = scalar_lea.vmem %s2, %s461
        %s463 = sadd.s32 %s27, %s28
        %p464 = scmp.lt.s32.totalorder %s463, 0
        %s465 = scalar_select %p464, %s463, 0
        %p466 = scmp.lt.s32.totalorder %s26, 1
        %s467 = scalar_select %p466, %s26, 1
        %s468 = smul.addr %s467, 4
        %s469 = scalar_lea.vmem %s3, %s468
        %p470 = scmp.lt.s32.totalorder %s26, 1
        %s471 = scalar_select %p470, %s26, 1
        %s472 = smul.addr %s471, 4
        %s473 = scalar_lea.vmem %s4, %s472
        %p474 = scmp.lt.s32.totalorder %s26, 1
        %s475 = scalar_select %p474, %s26, 1
        %s476 = smul.addr %s475, 4
        %s477 = scalar_lea.vmem %s6, %s476
        %v478 = vld [vmem:[%s435] sm:$0xf]
        %v479 = vld [vmem:[%s448] sm:$0xf]
        %v480 = vld [vmem:[%s462] sm:$0xff]
        %v481 = vld [vmem:[%s462 + $0x8] sm:$0xff]
        %v482 = vld [vmem:[%s462 + $0x10] sm:$0xff]
        %v483 = vld [vmem:[%s462 + $0x18] sm:$0xff]
        %v484 = vld [vmem:[%s462 + $0x20] sm:$0xff]
        %v485 = vld [vmem:[%s469] sm:$0xf]
        %v486 = vld [vmem:[%s473] sm:$0xf]
        %vm487 = vcmask 31744
        %v489 = vsel %vm487, %v486, 0
        %vm491 = vcmask 1043456
        %v493 = vsel %vm491, %v479, 0
        %495 = vmatprep.subr.mxu0 0.0
        %496 = vmatpush1.msra.mxu0 %v493
        %497 = vmatprep.subr.mxu0 0.0
        %498 = vmatpush1.msra.mxu0 0.0
        %499 = vmatprep.subr.mxu0 0.0
        %500 = vmatpush1.msra.mxu0 0.0
        %501 = vmatprep.subr.mxu0 0.0
        %502 = vmatpush1.msra.mxu0 0.0
        %503 = vmatprep.subr.mxu0 0.0
        %504 = vmatpush1.msra.mxu0 0.0
        %505 = vmatprep.subr.mxu0 0.0
        %506 = vmatpush1.msra.mxu0 0.0
        %507 = vmatprep.subr.mxu0 0.0
        %508 = vmatpush1.msra.mxu0 0.0
        %509 = vmatprep.subr.mxu0 0.0
        %510 = vmatpush1.msra.mxu0 0.0
        %511 = vmatprep.subr.mxu0 0.0
        %512 = vmatpush1.msra.mxu0 0.0
        %513 = vmatprep.subr.mxu0 0.0
        %514 = vmatpush1.msra.mxu0 0.0
        %515 = vmatprep.subr.mxu0 0.0
        %516 = vmatpush1.msra.mxu0 0.0
        %517 = vmatprep.subr.mxu0 0.0
        %518 = vmatpush1.msra.mxu0 0.0
        %519 = vmatprep.subr.mxu0 0.0
        %520 = vmatpush1.msra.mxu0 0.0
        %521 = vmatprep.subr.mxu0 0.0
        %522 = vmatpush1.msra.mxu0 0.0
        %523 = vmatprep.subr.mxu0 0.0
        %524 = vmatpush1.msra.mxu0 0.0
        %525 = vmatprep.subr.mxu0 0.0
        %526 = vmatpush1.msra.mxu0 0.0
        %527 = vmatprep.subr.mxu0 0.0
        %528 = vmatpush1.msra.mxu0 0.0
        %529 = vmatprep.subr.mxu0 0.0
        %530 = vmatpush1.msra.mxu0 0.0
        %531 = vmatprep.subr.mxu0 0.0
        %532 = vmatpush1.msra.mxu0 0.0
        %533 = vmatprep.subr.mxu0 0.0
        %534 = vmatpush1.msra.mxu0 0.0
        %535 = vmatprep.subr.mxu0 0.0
        %536 = vmatpush1.msra.mxu0 0.0
        %537 = vmatprep.subr.mxu0 0.0
        %538 = vmatpush1.msra.mxu0 0.0
        %539 = vmatprep.subr.mxu0 0.0
        %540 = vmatpush1.msra.mxu0 0.0
        %541 = vmatprep.subr.mxu0 0.0
        %542 = vmatpush1.msra.mxu0 0.0
        %543 = vmatprep.subr.mxu0 0.0
        %544 = vmatpush1.msra.mxu0 0.0
        %545 = vmatprep.subr.mxu0 0.0
        %546 = vmatpush1.msra.mxu0 0.0
        %547 = vmatprep.subr.mxu0 0.0
        %548 = vmatpush1.msra.mxu0 0.0
        %549 = vmatprep.subr.mxu0 0.0
        %550 = vmatpush1.msra.mxu0 0.0
        %551 = vmatprep.subr.mxu0 0.0
        %552 = vmatpush1.msra.mxu0 0.0
        %553 = vmatprep.subr.mxu0 0.0
        %554 = vmatpush1.msra.mxu0 0.0
        %555 = vmatprep.subr.mxu0 0.0
        %556 = vmatpush1.msra.mxu0 0.0
        %557 = vmatprep.subr.mxu0 0.0
        %558 = vmatpush1.msra.mxu0 0.0
        %559 = vmatprep.mubr.f32.mxu0 0.0
        %560 = vmatmul.mubr.f32.gmra.mrb[0].mxu0 %v489
        %v561 = vpop.f32.mrb[0].mxu0
        %v562 = vadd.f32 0.0, %v561
        %v563 = vpop.f32.mrb[0].mxu0
        %564 = vdwg.mxu0
        %v566 = vsel %vm487, %v485, 0
        %v569 = vsel %vm491, %v478, 0
        %571 = vmatprep.subr.mxu0 0.0
        %572 = vmatpush1.msra.mxu0 %v569
        %573 = vmatprep.subr.mxu0 0.0
        %574 = vmatpush1.msra.mxu0 0.0
        %575 = vmatprep.subr.mxu0 0.0
        %576 = vmatpush1.msra.mxu0 0.0
        %577 = vmatprep.subr.mxu0 0.0
        %578 = vmatpush1.msra.mxu0 0.0
        %579 = vmatprep.subr.mxu0 0.0
        %580 = vmatpush1.msra.mxu0 0.0
        %581 = vmatprep.subr.mxu0 0.0
        %582 = vmatpush1.msra.mxu0 0.0
        %583 = vmatprep.subr.mxu0 0.0
        %584 = vmatpush1.msra.mxu0 0.0
        %585 = vmatprep.subr.mxu0 0.0
        %586 = vmatpush1.msra.mxu0 0.0
        %587 = vmatprep.subr.mxu0 0.0
        %588 = vmatpush1.msra.mxu0 0.0
        %589 = vmatprep.subr.mxu0 0.0
        %590 = vmatpush1.msra.mxu0 0.0
        %591 = vmatprep.subr.mxu0 0.0
        %592 = vmatpush1.msra.mxu0 0.0
        %593 = vmatprep.subr.mxu0 0.0
        %594 = vmatpush1.msra.mxu0 0.0
        %595 = vmatprep.subr.mxu0 0.0
        %596 = vmatpush1.msra.mxu0 0.0
        %597 = vmatprep.subr.mxu0 0.0
        %598 = vmatpush1.msra.mxu0 0.0
        %599 = vmatprep.subr.mxu0 0.0
        %600 = vmatpush1.msra.mxu0 0.0
        %601 = vmatprep.subr.mxu0 0.0
        %602 = vmatpush1.msra.mxu0 0.0
        %603 = vmatprep.subr.mxu0 0.0
        %604 = vmatpush1.msra.mxu0 0.0
        %605 = vmatprep.subr.mxu0 0.0
        %606 = vmatpush1.msra.mxu0 0.0
        %607 = vmatprep.subr.mxu0 0.0
        %608 = vmatpush1.msra.mxu0 0.0
        %609 = vmatprep.subr.mxu0 0.0
        %610 = vmatpush1.msra.mxu0 0.0
        %611 = vmatprep.subr.mxu0 0.0
        %612 = vmatpush1.msra.mxu0 0.0
        %613 = vmatprep.subr.mxu0 0.0
        %614 = vmatpush1.msra.mxu0 0.0
        %615 = vmatprep.subr.mxu0 0.0
        %616 = vmatpush1.msra.mxu0 0.0
        %617 = vmatprep.subr.mxu0 0.0
        %618 = vmatpush1.msra.mxu0 0.0
        %619 = vmatprep.subr.mxu0 0.0
        %620 = vmatpush1.msra.mxu0 0.0
        %621 = vmatprep.subr.mxu0 0.0
        %622 = vmatpush1.msra.mxu0 0.0
        %623 = vmatprep.subr.mxu0 0.0
        %624 = vmatpush1.msra.mxu0 0.0
        %625 = vmatprep.subr.mxu0 0.0
        %626 = vmatpush1.msra.mxu0 0.0
        %627 = vmatprep.subr.mxu0 0.0
        %628 = vmatpush1.msra.mxu0 0.0
        %629 = vmatprep.subr.mxu0 0.0
        %630 = vmatpush1.msra.mxu0 0.0
        %631 = vmatprep.subr.mxu0 0.0
        %632 = vmatpush1.msra.mxu0 0.0
        %633 = vmatprep.subr.mxu0 0.0
        %634 = vmatpush1.msra.mxu0 0.0
        %635 = vmatprep.mubr.f32.mxu0 0.0
        %636 = vmatmul.mubr.f32.gmra.mrb[0].mxu0 %v566
        %v637 = vpop.f32.mrb[0].mxu0
        %v638 = vadd.f32 %v562, %v637
        %v639 = vpop.f32.mrb[0].mxu0
        %640 = vdwg.mxu0
        %v641 = vld [vmem:[%s5] sm:$0xf]
        %vm642 = vcmask 326656
        %v644 = vsel %vm642, %v641, 0
        %646 = vmatprep.subr.mxu0 0.0
        %647 = vmatpush1.msra.mxu0 %v480
        %648 = vmatprep.subr.mxu0 0.0
        %649 = vmatpush1.msra.mxu0 %v481
        %650 = vmatprep.subr.mxu0 0.0
        %651 = vmatpush1.msra.mxu0 %v482
        %652 = vmatprep.subr.mxu0 0.0
        %653 = vmatpush1.msra.mxu0 %v483
        %654 = vmatprep.subr.mxu0 0.0
        %655 = vmatpush1.msra.mxu0 %v484
        %656 = vmatprep.subr.mxu0 0.0
        %657 = vmatpush1.msra.mxu0 0.0
        %658 = vmatprep.subr.mxu0 0.0
        %659 = vmatpush1.msra.mxu0 0.0
        %660 = vmatprep.subr.mxu0 0.0
        %661 = vmatpush1.msra.mxu0 0.0
        %662 = vmatprep.subr.mxu0 0.0
        %663 = vmatpush1.msra.mxu0 0.0
        %664 = vmatprep.subr.mxu0 0.0
        %665 = vmatpush1.msra.mxu0 0.0
        %666 = vmatprep.subr.mxu0 0.0
        %667 = vmatpush1.msra.mxu0 0.0
        %668 = vmatprep.subr.mxu0 0.0
        %669 = vmatpush1.msra.mxu0 0.0
        %670 = vmatprep.subr.mxu0 0.0
        %671 = vmatpush1.msra.mxu0 0.0
        %672 = vmatprep.subr.mxu0 0.0
        %673 = vmatpush1.msra.mxu0 0.0
        %674 = vmatprep.subr.mxu0 0.0
        %675 = vmatpush1.msra.mxu0 0.0
        %676 = vmatprep.subr.mxu0 0.0
        %677 = vmatpush1.msra.mxu0 0.0
        %678 = vmatprep.subr.mxu0 0.0
        %679 = vmatpush1.msra.mxu0 0.0
        %680 = vmatprep.subr.mxu0 0.0
        %681 = vmatpush1.msra.mxu0 0.0
        %682 = vmatprep.subr.mxu0 0.0
        %683 = vmatpush1.msra.mxu0 0.0
        %684 = vmatprep.subr.mxu0 0.0
        %685 = vmatpush1.msra.mxu0 0.0
        %686 = vmatprep.subr.mxu0 0.0
        %687 = vmatpush1.msra.mxu0 0.0
        %688 = vmatprep.subr.mxu0 0.0
        %689 = vmatpush1.msra.mxu0 0.0
        %690 = vmatprep.subr.mxu0 0.0
        %691 = vmatpush1.msra.mxu0 0.0
        %692 = vmatprep.subr.mxu0 0.0
        %693 = vmatpush1.msra.mxu0 0.0
        %694 = vmatprep.subr.mxu0 0.0
        %695 = vmatpush1.msra.mxu0 0.0
        %696 = vmatprep.subr.mxu0 0.0
        %697 = vmatpush1.msra.mxu0 0.0
        %698 = vmatprep.subr.mxu0 0.0
        %699 = vmatpush1.msra.mxu0 0.0
        %700 = vmatprep.subr.mxu0 0.0
        %701 = vmatpush1.msra.mxu0 0.0
        %702 = vmatprep.subr.mxu0 0.0
        %703 = vmatpush1.msra.mxu0 0.0
        %704 = vmatprep.subr.mxu0 0.0
        %705 = vmatpush1.msra.mxu0 0.0
        %706 = vmatprep.subr.mxu0 0.0
        %707 = vmatpush1.msra.mxu0 0.0
        %708 = vmatprep.subr.mxu0 0.0
        %709 = vmatpush1.msra.mxu0 0.0
        %710 = vmatprep.mubr.f32.mxu0 0.0
        %711 = vmatmul.mubr.f32.gmra.mrb[0].mxu0 %v644
        %v712 = vpop.f32.mrb[0].mxu0
        %v713 = vadd.f32 0.0, %v712
        %v714 = vpop.f32.mrb[0].mxu0
        %715 = vdwg.mxu0
        %v716 = vadd.f32 %v638, %v713
        %v717 = vld [vmem:[%s477] sm:$0xf]
        %719 = vset.pattern.permute.xlu0 0
        %720 = vperm.xlu0 %719, %v717
        %v721 = vpop.permute.xlu0 %720
        %v723 = vadd.f32 %v716, %v721
        %v724 = vsub.f32 %v723, %v479
        %v725 = vlaneseq
        %v726 = vand.u32 %v725, 127
        %s727 = sadd.s32 %s27, %s28
        %s728 = smul.u32 %s727, 16
        %v729 = vstv %s728
        %v730 = vadd.s32 %v726, %v729
        %vm731 = vcmp.lt.s32.totalorder %v730, 16
        %v732 = vmul.f32 %v724, %v724
        %v733 = vsel %vm731, 1, 0
        %vm734 = vcmp.eq.s32.totalorder %v733, 1
        %v735 = vsel %vm734, %v732, 0.0
        %p736 = scmp.eq.s32.totalorder %s28, 0
        // Predicated region
        $region49: #{tpu_custom_call.1} parent=47 // pred_check
          %p737 = pneg %p736
        $region50: #{tpu_custom_call.1} parent=47 // pred_check_branch
          %739 = sbr.rel (%p737) target = $region52
        $region51: #{tpu_custom_call.1} parent=47 // pred_region
          %vm740 = vcmask 125952
          %741 = vst.msk [vmem:[#allocation2] sm:$0xf] %vm740, %v735
        $region52: #{tpu_custom_call.1} parent=47 // pred_fallthru
          _
        %p742 = scmp.ne.s32.totalorder %s28, 0
        // Predicated region
        $region53: #{tpu_custom_call.1} parent=47 // pred_check
          %p743 = pneg %p742
        $region54: #{tpu_custom_call.1} parent=47 // pred_check_branch
          %745 = sbr.rel (%p743) target = $region56
        $region55: #{tpu_custom_call.1} parent=47 // pred_region
          %v746 = vld [vmem:[#allocation2] sm:$0xf]
          %v747 = vadd.f32 %v746, %v735
          %vm748 = vcmask 125952
          %749 = vst.msk [vmem:[#allocation2] sm:$0xf] %vm748, %v747
        $region56: #{tpu_custom_call.1} parent=47 // pred_fallthru
          _
        // Predicated region
        $region57: #{tpu_custom_call.1} parent=47 // pred_check
          %p750 = pneg %p736
        $region58: #{tpu_custom_call.1} parent=47 // pred_check_branch
          %752 = sbr.rel (%p750) target = $region60
        $region59: #{tpu_custom_call.1} parent=47 // pred_region
          %v753 = vld [vmem:[#allocation2] sm:$0xf]
          %vm754 = vcmask 125952
          %v755 = vsel %vm754, %v753, 0.0
          %756 = vadd.xlane.f32.xlu0 %v755
          %v757 = vpop.xlane.xlu0 %756
          %v758 = vrot.slane %v757, 4
          %v759 = vadd.f32 %v757, %v758
          %v760 = vrot.slane %v759, 2
          %v761 = vadd.f32 %v759, %v760
          %v762 = vrot.slane %v761, 1
          %v763 = vadd.f32 %v761, %v762
          %s764 = vtos %v763
          %s765 = smul.f32 %s764, 0.015625
          %v766 = vstv %s765
          %767 = vst [vmem:[%s425] sm:$0x1] %v766
        $region60: #{tpu_custom_call.1} parent=47 // pred_fallthru
          _
        %s768 = sand.u32 %s251, 1
        %s769 = scalar_lea.sflag [#allocation4], %s768
        %s770 = sand.u32 %s251, 1
        %s771 = scalar_lea.vmem [#allocation3], %s770
        // Predicated region
        $region61: #{tpu_custom_call.1} parent=47 // pred_check
          %p772 = pneg %p261
        $region62: #{tpu_custom_call.1} parent=47 // pred_check_branch
          %774 = sbr.rel (%p772) target = $region64
        $region63: #{tpu_custom_call.1} parent=47 // pred_region
          %s776 = ssub.s32 16, 16
          %777 = vsyncadd %s769, %s776
          %s778 = sadd.s32 %s27, %s26
          %s779 = smul.addr %s778, 16
          %s780 = scalar_lea.hbm %s7, %s779
          %s782 = sshll.u32 %s771, 4
          %s783 = int_to_ptr.vmem [resolvable:$true] %s782
          %785 = dma.vmem_to_hbm [thread:$0]  %s783, 16, %s780, %s769
        $region64: #{tpu_custom_call.1} parent=47 // pred_fallthru
          _
      $region48: #{tpu_custom_call.1} parent=5 // pred_fallthru
        _
      %p786 = scmp.le.s32.totalorder 2, %s16
      // Predicated region
      $region65: #{tpu_custom_call.1} parent=5 // pred_check
        %p787 = pneg %p786
      $region66: #{tpu_custom_call.1} parent=5 // pred_check_branch
        %789 = sbr.rel (%p787) target = $region68
      $region67: #{tpu_custom_call.1} parent=5 // pred_region
        %s790 = ssub.s32 %s16, 2
        // Predicated region
        $region69: #{tpu_custom_call.1} parent=67 // pred_check
          %p791 = pneg %p267
        $region70: #{tpu_custom_call.1} parent=67 // pred_check_branch
          %793 = sbr.rel (%p791) target = $region72
        $region71: #{tpu_custom_call.1} parent=67 // pred_region
          %s794 = sand.u32 %s252, 1
          %s795 = scalar_lea.sflag [#allocation4], %s794
          %s796 = sand.u32 %s252, 1
          %s797 = scalar_lea.vmem [#allocation3], %s796
          %798 = dma.done %s795, 16
        $region72: #{tpu_custom_call.1} parent=67 // pred_fallthru
          _
      $region68: #{tpu_custom_call.1} parent=5 // pred_fallthru
        _
    $region6: #{tpu_custom_call.1} parent=1 // loop_footer
      %s20 = sadd.s32 1, %s16
    $region7: #{tpu_custom_call.1} parent=1 // loop_footer_branch
      %15 = sbr.rel target = $region3
    $region8: #{tpu_custom_call.1} parent=1 // loop_exit
      _
    %799 = vsyncpa [#allocation4], 1
    %s800 = scalar_lea.sflag [#allocation4], 1
    %801 = vsyncpa %s800, 1

</llo_original>
